<compile_context>
chip_gen: v5e
topology: v5e:2x2
jax: 0.10.0
libtpu: 0.0.40
codegen_flags: <defaults>
</compile_context>

<pallas_src>
import jax
import jax.numpy as jnp
from jax.experimental import pallas as pl
from jax.experimental.pallas import tpu as pltpu

LANE = 128
N_OUT = 8  # rows: n_mask, ce, n_pos, mse, mask&pred, pos&pred, n_1h, mse_1h


# --------------------------------------------------------------------------- #
# Kernel
# --------------------------------------------------------------------------- #
def _qpe_stats_kernel(t_ref, o_ref, out_ref, acc_ref):
    """One (batch, parallel-split, spatial-tile) grid step.

    t_ref  : (1, T, tile)         targets
    o_ref  : (1, 3, T, tile)      [rnr0 | rnr1 | qpe] channel groups of `outputs`
    out_ref: (1, 1, N_OUT, tile)  per-(batch, split) partial-stat slab (resident
                                  across the spatial axis -> used as accumulator
                                  for the two 1-hour rows)
    acc_ref: (6, T, tile)         full-resolution VMEM accumulator (VALU-only adds)
    """
    s_idx = pl.program_id(2)
    last = pl.num_programs(2) - 1

    @pl.when(s_idx == 0)
    def _init():
        acc_ref[...] = jnp.zeros_like(acc_ref)
        out_ref[...] = jnp.zeros_like(out_ref)

    t = t_ref[0].astype(jnp.float32)          # (T, tile)
    r0 = o_ref[0, 0].astype(jnp.float32)      # (T, tile)
    r1 = o_ref[0, 1].astype(jnp.float32)
    q = o_ref[0, 2].astype(jnp.float32)

    mask = t >= 0.0                           # valid pixels
    pos = t > 0.0                             # rainy pixels (CE label 1, QPE support)
    maskf = mask.astype(jnp.float32)
    posf = pos.astype(jnp.float32)

    # Stable 2-class cross entropy as a single softplus of one logit difference:
    #   label 1: log(1 + exp(r0 - r1)) ; label 0: log(1 + exp(r1 - r0))
    d0 = r0 - r1
    dsel = jnp.where(pos, d0, -d0)
    ce = jnp.where(mask,
                   jnp.maximum(dsel, 0.0) + jnp.log1p(jnp.exp(-jnp.abs(d0))),
                   0.0)

    # 1-minute QPE squared error on rainy pixels.
    qd = q - t
    se = jnp.where(pos, qd * qd, 0.0)

    # Confusion-matrix ingredients (pos is a subset of mask).
    predf = (d0 < 0.0).astype(jnp.float32)    # argmax == class 1  <=>  r1 > r0
    mp = maskf * predf                        # mask & pred
    pp = posf * predf                         # pos  & pred  (== cm11)

    # Full-resolution accumulation: pure VALU adds, no per-step sublane reduction,
    # no concatenate.  T-axis reduction is deferred to the flush below.
    acc_ref[0] += maskf
    acc_ref[1] += ce
    acc_ref[2] += posf
    acc_ref[3] += se
    acc_ref[4] += mp
    acc_ref[5] += pp

    # 1-hour stats: the time sum must happen inside the step (square of a sum),
    # gated by validity of time step 0 (torch semantics).  One sublane reduce.
    mask0 = mask[0:1, :]                                     # (1, tile)
    dsum = jnp.sum(qd, axis=0, keepdims=True)                # (1, tile)
    se1h = jnp.where(mask0, dsum * dsum, 0.0)
    out_ref[0, 0, 6:7, :] = out_ref[0, 0, 6:7, :] + mask0.astype(jnp.float32)
    out_ref[0, 0, 7:8, :] = out_ref[0, 0, 7:8, :] + se1h

    @pl.when(s_idx == last)
    def _flush():
        # Time-axis reductions once per (batch, split) instead of once per step.
        for k in range(6):
            out_ref[0, 0, k:k + 1, :] = jnp.sum(acc_ref[k], axis=0, keepdims=True)


# --------------------------------------------------------------------------- #
# Tiling / VMEM budgeting
# --------------------------------------------------------------------------- #
def _vmem_budget():
    """(tile budget, vmem_limit_bytes) sized to the actual generation."""
    phys = None
    try:
        info = pltpu.get_tpu_info()
        for attr in ("vmem_capacity_bytes", "vmem_bytes", "vmem_size_bytes"):
            v = getattr(info, attr, None)
            if isinstance(v, int) and v > 0:
                phys = v
                break
    except Exception:
        phys = None
    if phys is None:
        phys = 64 << 20  # assume the most restrictive case (v7x: 64 MiB / TC)
    if phys <= (72 << 20):          # v7x-class
        return 44 << 20, 52 << 20
    return 88 << 20, 100 << 20      # v5e / v6e (128 MiB physical)


def _bytes_per_lane(T):
    # double-buffered inputs (targets + 3-channel outputs) + full-res accumulator
    # + (conservatively double-buffered) 8-row output slab, all float32.
    return 4 * (2 * (T + 3 * T) + 6 * T + 2 * N_OUT)


def _pick_tile(S2, T, budget_bytes):
    """Largest lane-dense spatial tile that fits the VMEM budget and divides S2."""
    cap = max(LANE, (budget_bytes // _bytes_per_lane(T)) // LANE * LANE)
    if S2 <= cap:
        return S2, 1, False         # single block (block dim == full array dim)
    if S2 % LANE == 0:
        m = S2 // LANE
        best = 1
        d = 1
        while d * d <= m:           # largest divisor f of m with f*LANE <= cap
            if m % d == 0:
                for f in (d, m // d):
                    if f * LANE <= cap and f > best:
                        best = f
            d += 1
        tile = best * LANE
        return tile, S2 // tile, False
    # TODO(synk): ragged fallback pads (one extra HBM pass over both tensors); only
    # reachable when S*S is neither a multiple of 128 nor small enough for one block.
    return cap, -1, True


# --------------------------------------------------------------------------- #
# Wrapper
# --------------------------------------------------------------------------- #
@jax.jit
def qpe_loss_fcn(p, outputs, targets):
    """JAX/Pallas equivalent of QPELoss_fcn().forward(p, outputs, targets)
    with the module's default flags.

    p:       (>=2,) loss-balancing parameters
    outputs: (bs, 3*nsteps, S, S)  NCHW  [rnr0 | rnr1 | qpe]
    targets: (bs, nsteps, S, S)    NCHW
    Returns (loss_qpe_1min, loss_qpe_1h, loss_rnr, loss, cm, loss_segments).
    """
    bs, nsteps, S, _ = targets.shape
    S2 = S * S

    # Free, copy-less reshapes of contiguous NCHW tensors.
    t = targets.reshape(bs, nsteps, S2)
    o = outputs.reshape(bs, 3, nsteps, S2)

    budget, vmem_limit = _vmem_budget()
    tile, n_spatial, need_pad = _pick_tile(S2, nsteps, budget)
    if need_pad:  # extremely unlikely; see _pick_tile TODO
        S2f = -(-S2 // tile) * tile
        padw = S2f - S2
        t = jnp.pad(t, ((0, 0), (0, 0), (0, padw)), constant_values=-1.0)
        o = jnp.pad(o, ((0, 0), (0, 0), (0, 0), (0, padw)))
        n_spatial = S2f // tile

    # Guarantee both TensorCores get work on v7x even when bs == 1.
    n_par = 2 if (bs == 1 and n_spatial >= 2 and n_spatial % 2 == 0) else 1
    n_inner = n_spatial // n_par

    slab = pl.pallas_call(
        _qpe_stats_kernel,
        out_shape=jax.ShapeDtypeStruct((bs, n_par, N_OUT, tile), jnp.float32),
        grid=(bs, n_par, n_inner),
        in_specs=[
            pl.BlockSpec((1, nsteps, tile),
                         lambda b, pi, s, _n=n_inner: (b, 0, pi * _n + s)),
            pl.BlockSpec((1, 3, nsteps, tile),
                         lambda b, pi, s, _n=n_inner: (b, 0, 0, pi * _n + s)),
        ],
        out_specs=pl.BlockSpec((1, 1, N_OUT, tile),
                               lambda b, pi, s: (b, pi, 0, 0)),
        scratch_shapes=[pltpu.VMEM((6, nsteps, tile), jnp.float32)],
        compiler_params=pltpu.CompilerParams(
            dimension_semantics=("parallel", "parallel", "arbitrary"),
            vmem_limit_bytes=vmem_limit),
    )(t, o)

    # Epilogue: cross-lane reduction of the tiny partial slab in plain JAX.
    # Count rows are reduced in int32 so the confusion matrix / denominators stay
    # exact past float32's 2^24 integer limit.
    def fsum(i):
        return jnp.sum(slab[:, :, i, :])

    def isum(i):
        return jnp.sum(slab[:, :, i, :].astype(jnp.int32))

    n_mask, ce_sum = isum(0), fsum(1)
    n_pos, mse_sum = isum(2), fsum(3)
    mp_sum, cm11 = isum(4), isum(5)
    n_1h, mse1h_sum = isum(6), fsum(7)

    loss_rnr = ce_sum / n_mask.astype(jnp.float32)        # CE mean over masked pixels
    loss_qpe_1min = mse_sum / n_pos.astype(jnp.float32)   # MSE over target>0 pixels
    loss_qpe_1h = mse1h_sum / n_1h.astype(jnp.float32)    # no-grad branch in torch ref

    # Confusion matrix from 2 kernel sums + algebra (pos is a subset of mask).
    cm01 = mp_sum - cm11
    cm10 = n_pos - cm11
    cm00 = n_mask - n_pos - cm01
    cm = jnp.stack([cm00, cm01, cm10, cm11]).reshape(2, 2).astype(jnp.int32)

    pf = p.astype(jnp.float32)
    loss = (0.5 / (pf[0] * pf[0])) * loss_qpe_1min + (0.5 / (pf[1] * pf[1])) * loss_rnr
    # default flags are all False -> only p[0], p[1] enter the log-regularizer
    loss = loss + jnp.log(1.0 + pf[0] * pf[0] + pf[1] * pf[1])
    loss_segments = 0.0  # eval_segments=False branch
    # TODO(synk): the torch code's .item()/cpu().numpy() host extraction and the
    # eval_qpe_1h / eval_independent_qpe_1h / eval_segments branches are not
    # translated; JAX scalars / a (2,2) int32 array are returned instead.
    return loss_qpe_1min, loss_qpe_1h, loss_rnr, loss, cm, loss_segments


# --------------------------------------------------------------------------- #
# Pure-JAX reference (correctness check)
# --------------------------------------------------------------------------- #
def _reference(p, outputs, targets):
    bs, nsteps, S, _ = targets.shape
    S2 = S * S
    t = targets.reshape(bs, nsteps, S2).astype(jnp.float32)
    r0 = outputs[:, :nsteps].reshape(bs, nsteps, S2).astype(jnp.float32)
    r1 = outputs[:, nsteps:2 * nsteps].reshape(bs, nsteps, S2).astype(jnp.float32)
    q = outputs[:, 2 * nsteps:3 * nsteps].reshape(bs, nsteps, S2).astype(jnp.float32)
    mask = t >= 0.0
    pos = t > 0.0
    m = jnp.maximum(r0, r1)
    lse = m + jnp.log(jnp.exp(r0 - m) + jnp.exp(r1 - m))
    chosen = jnp.where(pos, r1, r0)
    loss_rnr = jnp.sum(jnp.where(mask, lse - chosen, 0.0)) / jnp.sum(mask)
    loss_1min = jnp.sum(jnp.where(pos, (q - t) ** 2, 0.0)) / jnp.sum(pos)
    mask0 = t[:, 0, :] >= 0.0
    loss_1h = jnp.sum(jnp.where(mask0, (q.sum(1) - t.sum(1)) ** 2, 0.0)) / jnp.sum(mask0)
    pred = r1 > r0
    cm = jnp.array(
        [[jnp.sum(mask & ~pos & ~pred), jnp.sum(mask & ~pos & pred)],
         [jnp.sum(mask & pos & ~pred), jnp.sum(mask & pos & pred)]], jnp.int32)
    pf = p.astype(jnp.float32)
    loss = (0.5 / (pf[0] * pf[0])) * loss_1min + (0.5 / (pf[1] * pf[1])) * loss_rnr
    loss = loss + jnp.log(1.0 + pf[0] * pf[0] + pf[1] * pf[1])
    return loss_1min, loss_1h, loss_rnr, loss, cm, 0.0


if __name__ == "__main__":
    key = jax.random.PRNGKey(0)
    k_t, k_o = jax.random.split(key, 2)

    bs, nsteps, S = 2, 8, 16
    # targets contain negatives (masked out) and positives (rain amounts)
    targets = jax.random.normal(k_t, (bs, nsteps, S, S), jnp.float32)
    # outputs: [rnr0 | rnr1 | qpe] stacked along channels (3*nsteps channels)
    outputs = 0.5 * jax.random.normal(k_o, (bs, 3 * nsteps, S, S), jnp.float32)
    p = jnp.array([1.0, 0.8, 1.2, 0.9], jnp.float32)

    res = qpe_loss_fcn(p, outputs, targets)
    jax.block_until_ready(res[3])
    jax.block_until_ready(res[4])

    # lightweight correctness check against the pure-JAX reference
    ref = _reference(p, outputs, targets)
    for got, want in zip(res[:4], ref[:4]):
        g, w = float(got), float(want)
        assert abs(g - w) <= 1e-4 * max(1.0, abs(w)), (g, w)
    assert bool(jnp.all(jnp.asarray(res[4]) == jnp.asarray(ref[4])))

    print("KERNEL_OK")
</pallas_src>

<mosaic_0001>
module attributes {stable_mosaic.version = 11 : i64} {
  func.func @_qpe_stats_kernel(%arg0: i32, %arg1: i32, %arg2: i32, %arg3: memref<1x8x256xf32, #tpu.memory_space<vmem>>, %arg4: memref<1x3x8x256xf32, #tpu.memory_space<vmem>>, %arg5: memref<1x1x8x256xf32, #tpu.memory_space<vmem>>, %arg6: memref<6x8x256xf32, #tpu.memory_space<vmem>>) attributes {dimension_semantics = [#tpu.dimension_semantics<parallel>, #tpu.dimension_semantics<parallel>, #tpu.dimension_semantics<arbitrary>], iteration_bounds = array<i64: 2, 1, 1>, scalar_prefetch = 0 : i64, scratch_operands = 1 : i64, tpu.core_type = #tpu.core_type<tc>, window_params = [{transform_indices = @transform_0, window_bounds = array<i64: 1, 8, 256>}, {transform_indices = @transform_1, window_bounds = array<i64: 1, 3, 8, 256>}, {transform_indices = @transform_2, window_bounds = array<i64: 1, 1, 8, 256>}]} {
    %c0_i32 = arith.constant 0 : i32
    %0 = arith.cmpi eq, %arg2, %c0_i32 : i32
    %1 = arith.extui %0 : i1 to i32
    %c0_i32_0 = arith.constant 0 : i32
    %2 = arith.cmpi ne, %1, %c0_i32_0 : i32
    scf.if %2 {
      %cst_71 = arith.constant 0.000000e+00 : f32
      %102 = vector.broadcast %cst_71 : f32 to vector<6x8x256xf32>
      %c0_72 = arith.constant 0 : index
      %c0_73 = arith.constant 0 : index
      %c0_74 = arith.constant 0 : index
      %103 = vector.load %arg6[%c0_72, %c0_73, %c0_74] : memref<6x8x256xf32, #tpu.memory_space<vmem>>, vector<6x8x256xf32>
      tpu.vector_store %arg6[%c0_72, %c0_73, %c0_74], %102 {strides = array<i32>} : memref<6x8x256xf32, #tpu.memory_space<vmem>>, vector<6x8x256xf32>,
      %cst_75 = arith.constant 0.000000e+00 : f32
      %104 = vector.broadcast %cst_75 : f32 to vector<1x1x8x256xf32>
      %c0_76 = arith.constant 0 : index
      %c0_77 = arith.constant 0 : index
      %c0_78 = arith.constant 0 : index
      %c0_79 = arith.constant 0 : index
      %105 = vector.load %arg5[%c0_76, %c0_77, %c0_78, %c0_79] : memref<1x1x8x256xf32, #tpu.memory_space<vmem>>, vector<1x1x8x256xf32>
      tpu.vector_store %arg5[%c0_76, %c0_77, %c0_78, %c0_79], %104 {strides = array<i32>} : memref<1x1x8x256xf32, #tpu.memory_space<vmem>>, vector<1x1x8x256xf32>,
    } else {
    }
    %c0 = arith.constant 0 : index
    %c0_1 = arith.constant 0 : index
    %c0_2 = arith.constant 0 : index
    %3 = vector.load %arg3[%c0, %c0_1, %c0_2] : memref<1x8x256xf32, #tpu.memory_space<vmem>>, vector<1x8x256xf32>
    %4 = vector.shape_cast %3 : vector<1x8x256xf32> to vector<8x256xf32>
    %c0_3 = arith.constant 0 : index
    %c0_4 = arith.constant 0 : index
    %c0_5 = arith.constant 0 : index
    %c0_6 = arith.constant 0 : index
    %5 = vector.load %arg4[%c0_3, %c0_4, %c0_5, %c0_6] : memref<1x3x8x256xf32, #tpu.memory_space<vmem>>, vector<1x1x8x256xf32>
    %6 = vector.shape_cast %5 : vector<1x1x8x256xf32> to vector<8x256xf32>
    %c0_7 = arith.constant 0 : index
    %c1 = arith.constant 1 : index
    %c0_8 = arith.constant 0 : index
    %c0_9 = arith.constant 0 : index
    %7 = vector.load %arg4[%c0_7, %c1, %c0_8, %c0_9] : memref<1x3x8x256xf32, #tpu.memory_space<vmem>>, vector<1x1x8x256xf32>
    %8 = vector.shape_cast %7 : vector<1x1x8x256xf32> to vector<8x256xf32>
    %c0_10 = arith.constant 0 : index
    %c2 = arith.constant 2 : index
    %c0_11 = arith.constant 0 : index
    %c0_12 = arith.constant 0 : index
    %9 = vector.load %arg4[%c0_10, %c2, %c0_11, %c0_12] : memref<1x3x8x256xf32, #tpu.memory_space<vmem>>, vector<1x1x8x256xf32>
    %10 = vector.shape_cast %9 : vector<1x1x8x256xf32> to vector<8x256xf32>
    %cst = arith.constant 0.000000e+00 : f32
    %11 = vector.broadcast %cst : f32 to vector<8x256xf32>
    %12 = arith.cmpf oge, %4, %11 : vector<8x256xf32>
    %cst_13 = arith.constant 0.000000e+00 : f32
    %13 = vector.broadcast %cst_13 : f32 to vector<8x256xf32>
    %14 = arith.cmpf ogt, %4, %13 : vector<8x256xf32>
    %15 = arith.extui %12 : vector<8x256xi1> to vector<8x256xi32>
    %16 = arith.sitofp %15 : vector<8x256xi32> to vector<8x256xf32>
    %17 = arith.extui %14 : vector<8x256xi1> to vector<8x256xi32>
    %18 = arith.sitofp %17 : vector<8x256xi32> to vector<8x256xf32>
    %19 = arith.subf %6, %8 : vector<8x256xf32>
    %cst_14 = arith.constant 0.000000e+00 : f32
    %20 = vector.broadcast %cst_14 : f32 to vector<8x256xf32>
    %21 = arith.subf %20, %19 : vector<8x256xf32>
    %22 = arith.select %14, %19, %21 : vector<8x256xi1>, vector<8x256xf32>
    %cst_15 = arith.constant 0.000000e+00 : f32
    %23 = vector.broadcast %cst_15 : f32 to vector<8x256xf32>
    %24 = arith.maximumf %22, %23 : vector<8x256xf32>
    %25 = math.absf %19 : vector<8x256xf32>
    %cst_16 = arith.constant 0.000000e+00 : f32
    %26 = vector.broadcast %cst_16 : f32 to vector<8x256xf32>
    %27 = arith.subf %26, %25 : vector<8x256xf32>
    %28 = math.exp %27 : vector<8x256xf32>
    %29 = math.log1p %28 : vector<8x256xf32>
    %30 = arith.addf %24, %29 : vector<8x256xf32>
    %cst_17 = arith.constant 0.000000e+00 : f32
    %31 = vector.broadcast %cst_17 : f32 to vector<8x256xf32>
    %32 = arith.select %12, %30, %31 : vector<8x256xi1>, vector<8x256xf32>
    %33 = arith.subf %10, %4 : vector<8x256xf32>
    %34 = arith.mulf %33, %33 : vector<8x256xf32>
    %cst_18 = arith.constant 0.000000e+00 : f32
    %35 = vector.broadcast %cst_18 : f32 to vector<8x256xf32>
    %36 = arith.select %14, %34, %35 : vector<8x256xi1>, vector<8x256xf32>
    %cst_19 = arith.constant 0.000000e+00 : f32
    %37 = vector.broadcast %cst_19 : f32 to vector<8x256xf32>
    %38 = arith.cmpf olt, %19, %37 : vector<8x256xf32>
    %39 = arith.extui %38 : vector<8x256xi1> to vector<8x256xi32>
    %40 = arith.sitofp %39 : vector<8x256xi32> to vector<8x256xf32>
    %41 = arith.mulf %16, %40 : vector<8x256xf32>
    %42 = arith.mulf %18, %40 : vector<8x256xf32>
    %c0_20 = arith.constant 0 : index
    %c0_21 = arith.constant 0 : index
    %c0_22 = arith.constant 0 : index
    %43 = vector.load %arg6[%c0_20, %c0_21, %c0_22] : memref<6x8x256xf32, #tpu.memory_space<vmem>>, vector<1x8x256xf32>
    %44 = vector.shape_cast %43 : vector<1x8x256xf32> to vector<8x256xf32>
    %45 = arith.addf %44, %16 : vector<8x256xf32>
    %c0_23 = arith.constant 0 : index
    %c0_24 = arith.constant 0 : index
    %c0_25 = arith.constant 0 : index
    %46 = vector.load %arg6[%c0_23, %c0_24, %c0_25] : memref<6x8x256xf32, #tpu.memory_space<vmem>>, vector<1x8x256xf32>
    %47 = vector.shape_cast %46 : vector<1x8x256xf32> to vector<8x256xf32>
    %48 = vector.shape_cast %45 : vector<8x256xf32> to vector<1x8x256xf32>
    tpu.vector_store %arg6[%c0_23, %c0_24, %c0_25], %48 {strides = array<i32>} : memref<6x8x256xf32, #tpu.memory_space<vmem>>, vector<1x8x256xf32>,
    %c1_26 = arith.constant 1 : index
    %c0_27 = arith.constant 0 : index
    %c0_28 = arith.constant 0 : index
    %49 = vector.load %arg6[%c1_26, %c0_27, %c0_28] : memref<6x8x256xf32, #tpu.memory_space<vmem>>, vector<1x8x256xf32>
    %50 = vector.shape_cast %49 : vector<1x8x256xf32> to vector<8x256xf32>
    %51 = arith.addf %50, %32 : vector<8x256xf32>
    %c1_29 = arith.constant 1 : index
    %c0_30 = arith.constant 0 : index
    %c0_31 = arith.constant 0 : index
    %52 = vector.load %arg6[%c1_29, %c0_30, %c0_31] : memref<6x8x256xf32, #tpu.memory_space<vmem>>, vector<1x8x256xf32>
    %53 = vector.shape_cast %52 : vector<1x8x256xf32> to vector<8x256xf32>
    %54 = vector.shape_cast %51 : vector<8x256xf32> to vector<1x8x256xf32>
    tpu.vector_store %arg6[%c1_29, %c0_30, %c0_31], %54 {strides = array<i32>} : memref<6x8x256xf32, #tpu.memory_space<vmem>>, vector<1x8x256xf32>,
    %c2_32 = arith.constant 2 : index
    %c0_33 = arith.constant 0 : index
    %c0_34 = arith.constant 0 : index
    %55 = vector.load %arg6[%c2_32, %c0_33, %c0_34] : memref<6x8x256xf32, #tpu.memory_space<vmem>>, vector<1x8x256xf32>
    %56 = vector.shape_cast %55 : vector<1x8x256xf32> to vector<8x256xf32>
    %57 = arith.addf %56, %18 : vector<8x256xf32>
    %c2_35 = arith.constant 2 : index
    %c0_36 = arith.constant 0 : index
    %c0_37 = arith.constant 0 : index
    %58 = vector.load %arg6[%c2_35, %c0_36, %c0_37] : memref<6x8x256xf32, #tpu.memory_space<vmem>>, vector<1x8x256xf32>
    %59 = vector.shape_cast %58 : vector<1x8x256xf32> to vector<8x256xf32>
    %60 = vector.shape_cast %57 : vector<8x256xf32> to vector<1x8x256xf32>
    tpu.vector_store %arg6[%c2_35, %c0_36, %c0_37], %60 {strides = array<i32>} : memref<6x8x256xf32, #tpu.memory_space<vmem>>, vector<1x8x256xf32>,
    %c3 = arith.constant 3 : index
    %c0_38 = arith.constant 0 : index
    %c0_39 = arith.constant 0 : index
    %61 = vector.load %arg6[%c3, %c0_38, %c0_39] : memref<6x8x256xf32, #tpu.memory_space<vmem>>, vector<1x8x256xf32>
    %62 = vector.shape_cast %61 : vector<1x8x256xf32> to vector<8x256xf32>
    %63 = arith.addf %62, %36 : vector<8x256xf32>
    %c3_40 = arith.constant 3 : index
    %c0_41 = arith.constant 0 : index
    %c0_42 = arith.constant 0 : index
    %64 = vector.load %arg6[%c3_40, %c0_41, %c0_42] : memref<6x8x256xf32, #tpu.memory_space<vmem>>, vector<1x8x256xf32>
    %65 = vector.shape_cast %64 : vector<1x8x256xf32> to vector<8x256xf32>
    %66 = vector.shape_cast %63 : vector<8x256xf32> to vector<1x8x256xf32>
    tpu.vector_store %arg6[%c3_40, %c0_41, %c0_42], %66 {strides = array<i32>} : memref<6x8x256xf32, #tpu.memory_space<vmem>>, vector<1x8x256xf32>,
    %c4 = arith.constant 4 : index
    %c0_43 = arith.constant 0 : index
    %c0_44 = arith.constant 0 : index
    %67 = vector.load %arg6[%c4, %c0_43, %c0_44] : memref<6x8x256xf32, #tpu.memory_space<vmem>>, vector<1x8x256xf32>
    %68 = vector.shape_cast %67 : vector<1x8x256xf32> to vector<8x256xf32>
    %69 = arith.addf %68, %41 : vector<8x256xf32>
    %c4_45 = arith.constant 4 : index
    %c0_46 = arith.constant 0 : index
    %c0_47 = arith.constant 0 : index
    %70 = vector.load %arg6[%c4_45, %c0_46, %c0_47] : memref<6x8x256xf32, #tpu.memory_space<vmem>>, vector<1x8x256xf32>
    %71 = vector.shape_cast %70 : vector<1x8x256xf32> to vector<8x256xf32>
    %72 = vector.shape_cast %69 : vector<8x256xf32> to vector<1x8x256xf32>
    tpu.vector_store %arg6[%c4_45, %c0_46, %c0_47], %72 {strides = array<i32>} : memref<6x8x256xf32, #tpu.memory_space<vmem>>, vector<1x8x256xf32>,
    %c5 = arith.constant 5 : index
    %c0_48 = arith.constant 0 : index
    %c0_49 = arith.constant 0 : index
    %73 = vector.load %arg6[%c5, %c0_48, %c0_49] : memref<6x8x256xf32, #tpu.memory_space<vmem>>, vector<1x8x256xf32>
    %74 = vector.shape_cast %73 : vector<1x8x256xf32> to vector<8x256xf32>
    %75 = arith.addf %74, %42 : vector<8x256xf32>
    %c5_50 = arith.constant 5 : index
    %c0_51 = arith.constant 0 : index
    %c0_52 = arith.constant 0 : index
    %76 = vector.load %arg6[%c5_50, %c0_51, %c0_52] : memref<6x8x256xf32, #tpu.memory_space<vmem>>, vector<1x8x256xf32>
    %77 = vector.shape_cast %76 : vector<1x8x256xf32> to vector<8x256xf32>
    %78 = vector.shape_cast %75 : vector<8x256xf32> to vector<1x8x256xf32>
    tpu.vector_store %arg6[%c5_50, %c0_51, %c0_52], %78 {strides = array<i32>} : memref<6x8x256xf32, #tpu.memory_space<vmem>>, vector<1x8x256xf32>,
    %79 = vector.extract_strided_slice %12 {offsets = [0, 0], sizes = [1, 256], strides = [1, 1]} : vector<8x256xi1> to vector<1x256xi1>
    %cst_53 = arith.constant dense<0.000000e+00> : vector<256xf32>
    %80 = vector.multi_reduction <add>, %33, %cst_53 [0] : vector<8x256xf32> to vector<256xf32>
    %81 = vector.shape_cast %80 : vector<256xf32> to vector<1x256xf32>
    %82 = arith.mulf %81, %81 : vector<1x256xf32>
    %cst_54 = arith.constant 0.000000e+00 : f32
    %83 = vector.broadcast %cst_54 : f32 to vector<1x256xf32>
    %84 = arith.select %79, %82, %83 : vector<1x256xi1>, vector<1x256xf32>
    %c0_55 = arith.constant 0 : index
    %c0_56 = arith.constant 0 : index
    %c6 = arith.constant 6 : index
    %c0_57 = arith.constant 0 : index
    %85 = vector.load %arg5[%c0_55, %c0_56, %c6, %c0_57] : memref<1x1x8x256xf32, #tpu.memory_space<vmem>>, vector<1x1x1x256xf32>
    %86 = vector.shape_cast %85 : vector<1x1x1x256xf32> to vector<1x256xf32>
    %87 = arith.extui %79 : vector<1x256xi1> to vector<1x256xi32>
    %88 = arith.sitofp %87 : vector<1x256xi32> to vector<1x256xf32>
    %89 = arith.addf %86, %88 : vector<1x256xf32>
    %c0_58 = arith.constant 0 : index
    %c0_59 = arith.constant 0 : index
    %c6_60 = arith.constant 6 : index
    %c0_61 = arith.constant 0 : index
    %90 = vector.load %arg5[%c0_58, %c0_59, %c6_60, %c0_61] : memref<1x1x8x256xf32, #tpu.memory_space<vmem>>, vector<1x1x1x256xf32>
    %91 = vector.shape_cast %90 : vector<1x1x1x256xf32> to vector<1x256xf32>
    %92 = vector.shape_cast %89 : vector<1x256xf32> to vector<1x1x1x256xf32>
    tpu.vector_store %arg5[%c0_58, %c0_59, %c6_60, %c0_61], %92 {strides = array<i32>} : memref<1x1x8x256xf32, #tpu.memory_space<vmem>>, vector<1x1x1x256xf32>,
    %c0_62 = arith.constant 0 : index
    %c0_63 = arith.constant 0 : index
    %c7 = arith.constant 7 : index
    %c0_64 = arith.constant 0 : index
    %93 = vector.load %arg5[%c0_62, %c0_63, %c7, %c0_64] : memref<1x1x8x256xf32, #tpu.memory_space<vmem>>, vector<1x1x1x256xf32>
    %94 = vector.shape_cast %93 : vector<1x1x1x256xf32> to vector<1x256xf32>
    %95 = arith.addf %94, %84 : vector<1x256xf32>
    %c0_65 = arith.constant 0 : index
    %c0_66 = arith.constant 0 : index
    %c7_67 = arith.constant 7 : index
    %c0_68 = arith.constant 0 : index
    %96 = vector.load %arg5[%c0_65, %c0_66, %c7_67, %c0_68] : memref<1x1x8x256xf32, #tpu.memory_space<vmem>>, vector<1x1x1x256xf32>
    %97 = vector.shape_cast %96 : vector<1x1x1x256xf32> to vector<1x256xf32>
    %98 = vector.shape_cast %95 : vector<1x256xf32> to vector<1x1x1x256xf32>
    tpu.vector_store %arg5[%c0_65, %c0_66, %c7_67, %c0_68], %98 {strides = array<i32>} : memref<1x1x8x256xf32, #tpu.memory_space<vmem>>, vector<1x1x1x256xf32>,
    %c0_i32_69 = arith.constant 0 : i32
    %99 = arith.cmpi eq, %arg2, %c0_i32_69 : i32
    %100 = arith.extui %99 : i1 to i32
    %c0_i32_70 = arith.constant 0 : i32
    %101 = arith.cmpi ne, %100, %c0_i32_70 : i32
    scf.if %101 {
      %c0_71 = arith.constant 0 : index
      %c0_72 = arith.constant 0 : index
      %c0_73 = arith.constant 0 : index
      %102 = vector.load %arg6[%c0_71, %c0_72, %c0_73] : memref<6x8x256xf32, #tpu.memory_space<vmem>>, vector<1x8x256xf32>
      %103 = vector.shape_cast %102 : vector<1x8x256xf32> to vector<8x256xf32>
      %cst_74 = arith.constant dense<0.000000e+00> : vector<256xf32>
      %104 = vector.multi_reduction <add>, %103, %cst_74 [0] : vector<8x256xf32> to vector<256xf32>
      %105 = vector.shape_cast %104 : vector<256xf32> to vector<1x256xf32>
      %c0_75 = arith.constant 0 : index
      %c0_76 = arith.constant 0 : index
      %c0_77 = arith.constant 0 : index
      %c0_78 = arith.constant 0 : index
      %106 = vector.load %arg5[%c0_75, %c0_76, %c0_77, %c0_78] : memref<1x1x8x256xf32, #tpu.memory_space<vmem>>, vector<1x1x1x256xf32>
      %107 = vector.shape_cast %106 : vector<1x1x1x256xf32> to vector<1x256xf32>
      %108 = vector.shape_cast %105 : vector<1x256xf32> to vector<1x1x1x256xf32>
      tpu.vector_store %arg5[%c0_75, %c0_76, %c0_77, %c0_78], %108 {strides = array<i32>} : memref<1x1x8x256xf32, #tpu.memory_space<vmem>>, vector<1x1x1x256xf32>,
      %c1_79 = arith.constant 1 : index
      %c0_80 = arith.constant 0 : index
      %c0_81 = arith.constant 0 : index
      %109 = vector.load %arg6[%c1_79, %c0_80, %c0_81] : memref<6x8x256xf32, #tpu.memory_space<vmem>>, vector<1x8x256xf32>
      %110 = vector.shape_cast %109 : vector<1x8x256xf32> to vector<8x256xf32>
      %cst_82 = arith.constant dense<0.000000e+00> : vector<256xf32>
      %111 = vector.multi_reduction <add>, %110, %cst_82 [0] : vector<8x256xf32> to vector<256xf32>
      %112 = vector.shape_cast %111 : vector<256xf32> to vector<1x256xf32>
      %c0_83 = arith.constant 0 : index
      %c0_84 = arith.constant 0 : index
      %c1_85 = arith.constant 1 : index
      %c0_86 = arith.constant 0 : index
      %113 = vector.load %arg5[%c0_83, %c0_84, %c1_85, %c0_86] : memref<1x1x8x256xf32, #tpu.memory_space<vmem>>, vector<1x1x1x256xf32>
      %114 = vector.shape_cast %113 : vector<1x1x1x256xf32> to vector<1x256xf32>
      %115 = vector.shape_cast %112 : vector<1x256xf32> to vector<1x1x1x256xf32>
      tpu.vector_store %arg5[%c0_83, %c0_84, %c1_85, %c0_86], %115 {strides = array<i32>} : memref<1x1x8x256xf32, #tpu.memory_space<vmem>>, vector<1x1x1x256xf32>,
      %c2_87 = arith.constant 2 : index
      %c0_88 = arith.constant 0 : index
      %c0_89 = arith.constant 0 : index
      %116 = vector.load %arg6[%c2_87, %c0_88, %c0_89] : memref<6x8x256xf32, #tpu.memory_space<vmem>>, vector<1x8x256xf32>
      %117 = vector.shape_cast %116 : vector<1x8x256xf32> to vector<8x256xf32>
      %cst_90 = arith.constant dense<0.000000e+00> : vector<256xf32>
      %118 = vector.multi_reduction <add>, %117, %cst_90 [0] : vector<8x256xf32> to vector<256xf32>
      %119 = vector.shape_cast %118 : vector<256xf32> to vector<1x256xf32>
      %c0_91 = arith.constant 0 : index
      %c0_92 = arith.constant 0 : index
      %c2_93 = arith.constant 2 : index
      %c0_94 = arith.constant 0 : index
      %120 = vector.load %arg5[%c0_91, %c0_92, %c2_93, %c0_94] : memref<1x1x8x256xf32, #tpu.memory_space<vmem>>, vector<1x1x1x256xf32>
      %121 = vector.shape_cast %120 : vector<1x1x1x256xf32> to vector<1x256xf32>
      %122 = vector.shape_cast %119 : vector<1x256xf32> to vector<1x1x1x256xf32>
      tpu.vector_store %arg5[%c0_91, %c0_92, %c2_93, %c0_94], %122 {strides = array<i32>} : memref<1x1x8x256xf32, #tpu.memory_space<vmem>>, vector<1x1x1x256xf32>,
      %c3_95 = arith.constant 3 : index
      %c0_96 = arith.constant 0 : index
      %c0_97 = arith.constant 0 : index
      %123 = vector.load %arg6[%c3_95, %c0_96, %c0_97] : memref<6x8x256xf32, #tpu.memory_space<vmem>>, vector<1x8x256xf32>
      %124 = vector.shape_cast %123 : vector<1x8x256xf32> to vector<8x256xf32>
      %cst_98 = arith.constant dense<0.000000e+00> : vector<256xf32>
      %125 = vector.multi_reduction <add>, %124, %cst_98 [0] : vector<8x256xf32> to vector<256xf32>
      %126 = vector.shape_cast %125 : vector<256xf32> to vector<1x256xf32>
      %c0_99 = arith.constant 0 : index
      %c0_100 = arith.constant 0 : index
      %c3_101 = arith.constant 3 : index
      %c0_102 = arith.constant 0 : index
      %127 = vector.load %arg5[%c0_99, %c0_100, %c3_101, %c0_102] : memref<1x1x8x256xf32, #tpu.memory_space<vmem>>, vector<1x1x1x256xf32>
      %128 = vector.shape_cast %127 : vector<1x1x1x256xf32> to vector<1x256xf32>
      %129 = vector.shape_cast %126 : vector<1x256xf32> to vector<1x1x1x256xf32>
      tpu.vector_store %arg5[%c0_99, %c0_100, %c3_101, %c0_102], %129 {strides = array<i32>} : memref<1x1x8x256xf32, #tpu.memory_space<vmem>>, vector<1x1x1x256xf32>,
      %c4_103 = arith.constant 4 : index
      %c0_104 = arith.constant 0 : index
      %c0_105 = arith.constant 0 : index
      %130 = vector.load %arg6[%c4_103, %c0_104, %c0_105] : memref<6x8x256xf32, #tpu.memory_space<vmem>>, vector<1x8x256xf32>
      %131 = vector.shape_cast %130 : vector<1x8x256xf32> to vector<8x256xf32>
      %cst_106 = arith.constant dense<0.000000e+00> : vector<256xf32>
      %132 = vector.multi_reduction <add>, %131, %cst_106 [0] : vector<8x256xf32> to vector<256xf32>
      %133 = vector.shape_cast %132 : vector<256xf32> to vector<1x256xf32>
      %c0_107 = arith.constant 0 : index
      %c0_108 = arith.constant 0 : index
      %c4_109 = arith.constant 4 : index
      %c0_110 = arith.constant 0 : index
      %134 = vector.load %arg5[%c0_107, %c0_108, %c4_109, %c0_110] : memref<1x1x8x256xf32, #tpu.memory_space<vmem>>, vector<1x1x1x256xf32>
      %135 = vector.shape_cast %134 : vector<1x1x1x256xf32> to vector<1x256xf32>
      %136 = vector.shape_cast %133 : vector<1x256xf32> to vector<1x1x1x256xf32>
      tpu.vector_store %arg5[%c0_107, %c0_108, %c4_109, %c0_110], %136 {strides = array<i32>} : memref<1x1x8x256xf32, #tpu.memory_space<vmem>>, vector<1x1x1x256xf32>,
      %c5_111 = arith.constant 5 : index
      %c0_112 = arith.constant 0 : index
      %c0_113 = arith.constant 0 : index
      %137 = vector.load %arg6[%c5_111, %c0_112, %c0_113] : memref<6x8x256xf32, #tpu.memory_space<vmem>>, vector<1x8x256xf32>
      %138 = vector.shape_cast %137 : vector<1x8x256xf32> to vector<8x256xf32>
      %cst_114 = arith.constant dense<0.000000e+00> : vector<256xf32>
      %139 = vector.multi_reduction <add>, %138, %cst_114 [0] : vector<8x256xf32> to vector<256xf32>
      %140 = vector.shape_cast %139 : vector<256xf32> to vector<1x256xf32>
      %c0_115 = arith.constant 0 : index
      %c0_116 = arith.constant 0 : index
      %c5_117 = arith.constant 5 : index
      %c0_118 = arith.constant 0 : index
      %141 = vector.load %arg5[%c0_115, %c0_116, %c5_117, %c0_118] : memref<1x1x8x256xf32, #tpu.memory_space<vmem>>, vector<1x1x1x256xf32>
      %142 = vector.shape_cast %141 : vector<1x1x1x256xf32> to vector<1x256xf32>
      %143 = vector.shape_cast %140 : vector<1x256xf32> to vector<1x1x1x256xf32>
      tpu.vector_store %arg5[%c0_115, %c0_116, %c5_117, %c0_118], %143 {strides = array<i32>} : memref<1x1x8x256xf32, #tpu.memory_space<vmem>>, vector<1x1x1x256xf32>,
    } else {
    }
    return
  }
  func.func @transform_0(%arg0: i32, %arg1: i32, %arg2: i32) -> (i32, i32, i32) {
    %c1_i32 = arith.constant 1 : i32
    %0 = arith.muli %arg1, %c1_i32 : i32
    %1 = arith.addi %0, %arg2 : i32
    %c0_i32 = arith.constant 0 : i32
    %c0_i32_0 = arith.constant 0 : i32
    return %arg0, %c0_i32, %1 : i32, i32, i32
  }
  func.func @transform_1(%arg0: i32, %arg1: i32, %arg2: i32) -> (i32, i32, i32, i32) {
    %c1_i32 = arith.constant 1 : i32
    %0 = arith.muli %arg1, %c1_i32 : i32
    %1 = arith.addi %0, %arg2 : i32
    %c0_i32 = arith.constant 0 : i32
    %c0_i32_0 = arith.constant 0 : i32
    %c0_i32_1 = arith.constant 0 : i32
    return %arg0, %c0_i32, %c0_i32_0, %1 : i32, i32, i32, i32
  }
  func.func @transform_2(%arg0: i32, %arg1: i32, %arg2: i32) -> (i32, i32, i32, i32) {
    %c0_i32 = arith.constant 0 : i32
    %c0_i32_0 = arith.constant 0 : i32
    %c0_i32_1 = arith.constant 0 : i32
    return %arg0, %arg1, %c0_i32, %c0_i32_0 : i32, i32, i32, i32
  }
}

</mosaic_0001>

<llo_original>
// kernel: qpe_loss_fcn.1
$region0: #{qpe_loss_fcn.1}
  #allocation0 [shape = 'u32[]', space=smem, size = 0x4, offset = 0x4, fixed_abs, tag = 'smem constant byte address 0x4 - core index']
  #allocation1 [shape = 'u32[72,128]{1,0:T(1,128)}', space=vmem, size = 0x9000, scoped, tag = 'internal scratch']
  #allocation2 [shape = 'f32[6,8,256]{2,1,0:T(8,128)}', space=vmem, size = 0xc000, scoped, tag = 'scratch operand']
  %s0 = inlined_call_operand.vmem [shape: f32[2,8,256], index: 0, kind: input, shape index: {}]
  %s1 = inlined_call_operand.vmem [shape: f32[2,3,8,256], index: 1, kind: input, shape index: {}]
  %s2 = inlined_call_operand.vmem [shape: f32[2,1,8,256], index: 2, kind: output, shape index: {}]
  %s3 = sld [smem:[#allocation0]]
  $region49: #{qpe_loss_fcn.1} parent=0
    _
  %s5 = ssub.s32 1, %s3
  %s6 = scalar_select 0, %s5, %s3
  loop: start=0, step=1, limit=4
  $region2: #{qpe_loss_fcn.1} parent=0 // loop_pre_header
    _
  $region3: #{qpe_loss_fcn.1} parent=0 // loop_header
    %s8 = sphi 0, %s12
    %p9 = scmp.ge.s32.totalorder %s8, 4
    %s15 = sphi 0, %s34
    %s16 = sphi 0, %s30
    %s17 = sphi 0, %s26
    %s18 = sphi 0, %s15
    %s19 = sphi 0, %s16
    %s20 = sphi 0, %s17
    %s21 = sphi 0, %s18
    %s22 = sphi 0, %s19
    %s23 = sphi 0, %s20
    %s41 = sphi 0, %s43
    %s44 = sphi 0, %s41
    %s45 = sphi 0, %s44
    %s61 = sphi 0, %s45
    %s71 = sphi 0, %s73
    %s74 = sphi 0, %s71
    %s75 = sphi 0, %s74
    %s91 = sphi 0, %s75
    %s99 = sphi 0, %s101
    %s102 = sphi 0, %s99
    %s103 = sphi 0, %s102
    %s119 = sphi 0, %s103
  $region4: #{qpe_loss_fcn.1} parent=0 // loop_header_branch
    %11 = sbr.rel (%p9) target = $region8
  $region5: #{qpe_loss_fcn.1} parent=0 // loop_body
    %s13 = ssub.s32 %s8, 1
    %s14 = ssub.s32 %s8, 2
    %s24 = sadd.s32 1, %s17
    %p25 = scmp.ge.s32.totalorder %s24, 1
    %s26 = scalar_select %p25, 0, %s24
    %s27 = sadd.s32 1, %s16
    %s28 = scalar_select %p25, %s27, %s16
    %p29 = scmp.ge.s32.totalorder %s28, 1
    %s30 = scalar_select %p29, 0, %s28
    %s31 = sadd.s32 1, %s15
    %s32 = scalar_select %p29, %s31, %s15
    %p33 = scmp.ge.s32.totalorder %s32, 2
    %s34 = scalar_select %p33, 0, %s32
    %s35 = sadd.s32 %s16, %s17
    %s36 = sadd.s32 %s30, %s26
    %s37 = ssub.s32 %s15, %s34
    %s38 = ssub.s32 %s35, %s36
    %s39 = sor.u32 %s37, %s38
    %p40 = scmp.eq.s32.totalorder %s39, 0
    %s42 = sadd.s32 %s41, 1
    %s43 = scalar_select %p40, %s41, %s42
    %p46 = pneg %p40
    %p47 = scmp.eq.s32.totalorder %s8, 1
    %p48 = por %p46, %p47
    %p49 = scmp.ne.s32.totalorder %s41, %s44
    %p50 = scmp.eq.s32.totalorder %s8, 0
    %p51 = por %p49, %p50
    %p52 = scmp.ne.s32.totalorder %s41, %s44
    %p53 = scmp.eq.s32.totalorder %s13, 1
    %p54 = por %p52, %p53
    %p55 = scmp.ne.s32.totalorder %s44, %s45
    %p56 = scmp.eq.s32.totalorder %s13, 0
    %p57 = por %p55, %p56
    %p58 = scmp.ne.s32.totalorder %s44, %s45
    %p59 = scmp.eq.s32.totalorder %s14, 1
    %p60 = por %p58, %p59
    %p62 = scmp.ne.s32.totalorder %s45, %s61
    %p63 = scmp.eq.s32.totalorder %s14, 0
    %p64 = por %p62, %p63
    %s65 = sadd.s32 %s16, %s17
    %s66 = sadd.s32 %s30, %s26
    %s67 = ssub.s32 %s15, %s34
    %s68 = ssub.s32 %s65, %s66
    %s69 = sor.u32 %s67, %s68
    %p70 = scmp.eq.s32.totalorder %s69, 0
    %s72 = sadd.s32 %s71, 1
    %s73 = scalar_select %p70, %s71, %s72
    %p76 = pneg %p70
    %p77 = scmp.eq.s32.totalorder %s8, 1
    %p78 = por %p76, %p77
    %p79 = scmp.ne.s32.totalorder %s71, %s74
    %p80 = scmp.eq.s32.totalorder %s8, 0
    %p81 = por %p79, %p80
    %p82 = scmp.ne.s32.totalorder %s71, %s74
    %p83 = scmp.eq.s32.totalorder %s13, 1
    %p84 = por %p82, %p83
    %p85 = scmp.ne.s32.totalorder %s74, %s75
    %p86 = scmp.eq.s32.totalorder %s13, 0
    %p87 = por %p85, %p86
    %p88 = scmp.ne.s32.totalorder %s74, %s75
    %p89 = scmp.eq.s32.totalorder %s14, 1
    %p90 = por %p88, %p89
    %p92 = scmp.ne.s32.totalorder %s75, %s91
    %p93 = scmp.eq.s32.totalorder %s14, 0
    %p94 = por %p92, %p93
    %s95 = ssub.s32 %s15, %s34
    %s96 = ssub.s32 %s16, %s30
    %s97 = sor.u32 %s95, %s96
    %p98 = scmp.eq.s32.totalorder %s97, 0
    %s100 = sadd.s32 %s99, 1
    %s101 = scalar_select %p98, %s99, %s100
    %p104 = pneg %p98
    %p105 = scmp.eq.s32.totalorder %s8, 1
    %p106 = por %p104, %p105
    %p107 = scmp.ne.s32.totalorder %s99, %s102
    %p108 = scmp.eq.s32.totalorder %s8, 0
    %p109 = por %p107, %p108
    %p110 = scmp.ne.s32.totalorder %s99, %s102
    %p111 = scmp.eq.s32.totalorder %s13, 1
    %p112 = por %p110, %p111
    %p113 = scmp.ne.s32.totalorder %s102, %s103
    %p114 = scmp.eq.s32.totalorder %s13, 0
    %p115 = por %p113, %p114
    %p116 = scmp.ne.s32.totalorder %s102, %s103
    %p117 = scmp.eq.s32.totalorder %s14, 1
    %p118 = por %p116, %p117
    %p120 = scmp.ne.s32.totalorder %s103, %s119
    %p121 = scmp.eq.s32.totalorder %s14, 0
    %p122 = por %p120, %p121
    %p123 = scmp.le.s32.totalorder 1, %s8
    %p124 = scmp.lt.s32.totalorder %s8, 3
    %p125 = pnand %p123, %p124
    %p126 = pneg %p125
    // Predicated region
    $region9: #{qpe_loss_fcn.1} parent=5 // pred_check
      _
    $region10: #{qpe_loss_fcn.1} parent=5 // pred_check_branch
      %128 = sbr.rel (%p125) target = $region12
    $region11: #{qpe_loss_fcn.1} parent=5 // pred_region
      %s129 = ssub.s32 %s8, 1
    $region12: #{qpe_loss_fcn.1} parent=5 // pred_fallthru
      _
    %p130 = scmp.lt.s32.totalorder %s8, 2
    // Predicated region
    $region13: #{qpe_loss_fcn.1} parent=5 // pred_check
      %p131 = pneg %p130
    $region14: #{qpe_loss_fcn.1} parent=5 // pred_check_branch
      %133 = sbr.rel (%p131) target = $region16
    $region15: #{qpe_loss_fcn.1} parent=5 // pred_region
      // Predicated region
      $region17: #{qpe_loss_fcn.1} parent=15 // pred_check
        %p134 = pneg %p51
      $region18: #{qpe_loss_fcn.1} parent=15 // pred_check_branch
        %136 = sbr.rel (%p134) target = $region20
      $region19: #{qpe_loss_fcn.1} parent=15 // pred_region
        %s137 = sadd.s32 %s16, %s17
        %s138 = smul.u32 2, %s137
        %p139 = scmp.lt.s32.totalorder %s15, 1
        %s140 = scalar_select %p139, %s15, 1
        %p141 = scmp.lt.s32.totalorder %s138, 1
        %s142 = scalar_select %p141, %s138, 1
        %s143 = smul.addr %s140, 2
        %s144 = sadd.s32 %s142, %s143
        %s145 = smul.addr %s144, 8
        %s146 = scalar_lea.vmem %s0, %s145
        %s147 = sadd.s32 %s16, %s17
        %s148 = smul.u32 2, %s147
      $region20: #{qpe_loss_fcn.1} parent=15 // pred_fallthru
        _
      // Predicated region
      $region21: #{qpe_loss_fcn.1} parent=15 // pred_check
        %p149 = pneg %p81
      $region22: #{qpe_loss_fcn.1} parent=15 // pred_check_branch
        %151 = sbr.rel (%p149) target = $region24
      $region23: #{qpe_loss_fcn.1} parent=15 // pred_region
        %s152 = sadd.s32 %s16, %s17
        %s153 = smul.u32 2, %s152
        %p154 = scmp.lt.s32.totalorder %s15, 1
        %s155 = scalar_select %p154, %s15, 1
        %p156 = scmp.lt.s32.totalorder %s153, 1
        %s157 = scalar_select %p156, %s153, 1
        %s158 = smul.addr %s155, 6
        %s159 = sadd.s32 %s157, %s158
        %s160 = smul.addr %s159, 8
        %s161 = scalar_lea.vmem %s1, %s160
        %s162 = sadd.s32 %s16, %s17
        %s163 = smul.u32 2, %s162
      $region24: #{qpe_loss_fcn.1} parent=15 // pred_fallthru
        _
    $region16: #{qpe_loss_fcn.1} parent=5 // pred_fallthru
      _
    %p164 = scmp.le.s32.totalorder 1, %s8
    %p165 = scmp.lt.s32.totalorder %s8, 3
    %p166 = pnand %p164, %p165
    %p167 = pneg %p166
    // Predicated region
    $region25: #{qpe_loss_fcn.1} parent=5 // pred_check
      _
    $region26: #{qpe_loss_fcn.1} parent=5 // pred_check_branch
      %169 = sbr.rel (%p166) target = $region28
    $region27: #{qpe_loss_fcn.1} parent=5 // pred_region
      %s170 = ssub.s32 %s8, 1
      %s171 = sadd.s32 %s19, %s20
      %s172 = smul.u32 2, %s171
      %p173 = scmp.lt.s32.totalorder %s18, 1
      %s174 = scalar_select %p173, %s18, 1
      %p175 = scmp.lt.s32.totalorder %s172, 1
      %s176 = scalar_select %p175, %s172, 1
      %s177 = smul.addr %s174, 2
      %s178 = sadd.s32 %s176, %s177
      %s179 = smul.addr %s178, 8
      %s180 = scalar_lea.vmem %s0, %s179
      %p181 = pneg %p57
      %p182 = pneg %p54
      %s183 = sadd.s32 %s19, %s20
      %s184 = smul.u32 2, %s183
      %p185 = scmp.lt.s32.totalorder %s18, 1
      %s186 = scalar_select %p185, %s18, 1
      %p187 = scmp.lt.s32.totalorder %s184, 1
      %s188 = scalar_select %p187, %s184, 1
      %s189 = smul.addr %s186, 6
      %s190 = sadd.s32 %s188, %s189
      %s191 = smul.addr %s190, 8
      %s192 = scalar_lea.vmem %s1, %s191
      %p193 = pneg %p87
      %p194 = pneg %p84
      %p195 = pneg %p115
      %p196 = pneg %p112
      %p197 = scmp.lt.s32.totalorder %s18, 1
      %s198 = scalar_select %p197, %s18, 1
      %p199 = scmp.lt.s32.totalorder %s19, 0
      %s200 = scalar_select %p199, %s19, 0
      %s201 = smul.addr %s200, 2
      %s202 = smul.addr %s198, 2
      %s203 = sadd.s32 %s201, %s202
      %s204 = smul.addr %s203, 8
      %s205 = scalar_lea.vmem %s2, %s204
      %s206 = sadd.s32 %s19, %s20
      %s207 = smul.u32 2, %s206
      %p208 = scmp.lt.s32.totalorder %s18, 1
      %s209 = scalar_select %p208, %s18, 1
      %p210 = scmp.lt.s32.totalorder %s207, 1
      %s211 = scalar_select %p210, %s207, 1
      %s212 = smul.addr %s209, 2
      %s213 = sadd.s32 %s211, %s212
      %s214 = smul.addr %s213, 8
      %s215 = scalar_lea.vmem %s0, %s214
      %s216 = sadd.s32 %s19, %s20
      %s217 = smul.u32 2, %s216
      %s218 = sadd.s32 %s19, %s20
      %s219 = smul.u32 2, %s218
      %p220 = scmp.lt.s32.totalorder %s18, 1
      %s221 = scalar_select %p220, %s18, 1
      %p222 = scmp.lt.s32.totalorder %s219, 1
      %s223 = scalar_select %p222, %s219, 1
      %s224 = smul.addr %s221, 6
      %s225 = sadd.s32 %s223, %s224
      %s226 = smul.addr %s225, 8
      %s227 = scalar_lea.vmem %s1, %s226
      %s228 = sadd.s32 %s19, %s20
      %s229 = smul.u32 2, %s228
      %p230 = scmp.lt.s32.totalorder %s18, 1
      %s231 = scalar_select %p230, %s18, 1
      %p232 = scmp.lt.s32.totalorder %s19, 0
      %s233 = scalar_select %p232, %s19, 0
      %s234 = smul.addr %s233, 2
      %s235 = smul.addr %s231, 2
      %s236 = sadd.s32 %s234, %s235
      %s237 = smul.addr %s236, 8
      %s238 = scalar_lea.vmem %s2, %s237
      %p239 = scmp.eq.s32.totalorder %s20, 0
      // Predicated region
      $region29: #{qpe_loss_fcn.1} parent=27 // pred_check
        %p240 = pneg %p239
      $region30: #{qpe_loss_fcn.1} parent=27 // pred_check_branch
        %242 = sbr.rel (%p240) target = $region32
      $region31: #{qpe_loss_fcn.1} parent=27 // pred_region
        %243 = vst [vmem:[#allocation2] sm:$0xff] 0.0
        %244 = vst [vmem:[#allocation2 + $0x8] sm:$0xff] 0.0
        %245 = vst [vmem:[#allocation2 + $0x10] sm:$0xff] 0.0
        %246 = vst [vmem:[#allocation2 + $0x18] sm:$0xff] 0.0
        %247 = vst [vmem:[#allocation2 + $0x20] sm:$0xff] 0.0
        %248 = vst [vmem:[#allocation2 + $0x28] sm:$0xff] 0.0
        %249 = vst [vmem:[#allocation2 + $0x30] sm:$0xff] 0.0
        %250 = vst [vmem:[#allocation2 + $0x38] sm:$0xff] 0.0
        %251 = vst [vmem:[#allocation2 + $0x40] sm:$0xff] 0.0
        %252 = vst [vmem:[#allocation2 + $0x48] sm:$0xff] 0.0
        %253 = vst [vmem:[#allocation2 + $0x50] sm:$0xff] 0.0
        %254 = vst [vmem:[#allocation2 + $0x58] sm:$0xff] 0.0
        %255 = vst [vmem:[%s238] sm:$0xff] 0.0
        %256 = vst [vmem:[%s238 + $0x8] sm:$0xff] 0.0
      $region32: #{qpe_loss_fcn.1} parent=27 // pred_fallthru
        _
      %v257 = vld [vmem:[%s215] sm:$0xff]
      %v258 = vld [vmem:[%s215 + $0x8] sm:$0xff]
      %v259 = vld [vmem:[%s227] sm:$0xff]
      %v260 = vld [vmem:[%s227 + $0x8] sm:$0xff]
      %s261 = scalar_lea.vmem %s227, 16
      %v262 = vld [vmem:[%s261] sm:$0xff]
      %v263 = vld [vmem:[%s261 + $0x8] sm:$0xff]
      %s264 = scalar_lea.vmem %s227, 32
      %v265 = vld [vmem:[%s264] sm:$0xff]
      %v266 = vld [vmem:[%s264 + $0x8] sm:$0xff]
      %vm267 = vcmp.ge.f32.partialorder %v257, 0.0
      %vm268 = vcmp.ge.f32.partialorder %v258, 0.0
      %vm269 = vcmp.gt.f32.partialorder %v257, 0.0
      %vm270 = vcmp.gt.f32.partialorder %v258, 0.0
      %v271 = vsel %vm267, 1, 0
      %v272 = vsel %vm268, 1, 0
      %v273 = vcvt.s32.f32 %v271
      %v274 = vcvt.s32.f32 %v272
      %v275 = vsel %vm269, 1, 0
      %v276 = vsel %vm270, 1, 0
      %v277 = vcvt.s32.f32 %v275
      %v278 = vcvt.s32.f32 %v276
      %v279 = vsub.f32 %v259, %v262
      %v280 = vsub.f32 %v260, %v263
      %v281 = vsub.f32 0.0, %v279
      %v282 = vsub.f32 0.0, %v280
      %v283 = vsel %vm269, %v279, %v281
      %v284 = vsel %vm270, %v280, %v282
      %v285 = vmax.f32 %v283, 0.0
      %v286 = vmax.f32 %v284, 0.0
      %v287 = vand.u32 2147483647, %v279
      %v288 = vand.u32 2147483647, %v280
      %v289 = vsub.f32 0.0, %v287
      %v290 = vsub.f32 0.0, %v288
      %v291 = vmul.f32 %v289, 1.442695
      %v292 = vpow.pop %v291
      %v293 = vmul.f32 %v290, 1.442695
      %v294 = vpow.pop %v293
      %v295 = vadd.f32 %v292, 1.0
      %v296 = vlog2.pop %v295
      %v297 = vmul.f32 %v296, 0.6931472
      %v298 = vmul.f32 -0.5, %v292
      %v299 = vadd.f32 %v298, 1.0
      %v300 = vmul.f32 %v299, %v292
      %v301 = vand.u32 2147483647, %v292
      %vm302 = vcmp.lt.f32.partialorder %v301, 0.0004427343
      %v303 = vsel %vm302, %v300, %v297
      %v304 = vadd.f32 %v294, 1.0
      %v305 = vlog2.pop %v304
      %v306 = vmul.f32 %v305, 0.6931472
      %v307 = vmul.f32 -0.5, %v294
      %v308 = vadd.f32 %v307, 1.0
      %v309 = vmul.f32 %v308, %v294
      %v310 = vand.u32 2147483647, %v294
      %vm311 = vcmp.lt.f32.partialorder %v310, 0.0004427343
      %v312 = vsel %vm311, %v309, %v306
      %v313 = vadd.f32 %v285, %v303
      %v314 = vadd.f32 %v286, %v312
      %v315 = vsel %vm267, %v313, 0.0
      %v316 = vsel %vm268, %v314, 0.0
      %v317 = vsub.f32 %v265, %v257
      %v318 = vsub.f32 %v266, %v258
      %v319 = vmul.f32 %v317, %v317
      %v320 = vmul.f32 %v318, %v318
      %v321 = vsel %vm269, %v319, 0.0
      %v322 = vsel %vm270, %v320, 0.0
      %vm323 = vcmp.lt.f32.partialorder %v279, 0.0
      %vm324 = vcmp.lt.f32.partialorder %v280, 0.0
      %v325 = vsel %vm323, 1, 0
      %v326 = vsel %vm324, 1, 0
      %v327 = vcvt.s32.f32 %v325
      %v328 = vcvt.s32.f32 %v326
      %v329 = vmul.f32 %v273, %v327
      %v330 = vmul.f32 %v274, %v328
      %v331 = vmul.f32 %v277, %v327
      %v332 = vmul.f32 %v278, %v328
      %v333 = vld [vmem:[#allocation2] sm:$0xff]
      %v334 = vld [vmem:[#allocation2 + $0x8] sm:$0xff]
      %v335 = vadd.f32 %v333, %v273
      %v336 = vadd.f32 %v334, %v274
      %337 = vst [vmem:[#allocation2] sm:$0xff] %v335
      %338 = vst [vmem:[#allocation2 + $0x8] sm:$0xff] %v336
      %s339 = scalar_lea.vmem [#allocation2], 16
      %v340 = vld [vmem:[%s339] sm:$0xff]
      %v341 = vld [vmem:[%s339 + $0x8] sm:$0xff]
      %v342 = vadd.f32 %v340, %v315
      %v343 = vadd.f32 %v341, %v316
      %344 = vst [vmem:[%s339] sm:$0xff] %v342
      %345 = vst [vmem:[%s339 + $0x8] sm:$0xff] %v343
      %s346 = scalar_lea.vmem [#allocation2], 32
      %v347 = vld [vmem:[%s346] sm:$0xff]
      %v348 = vld [vmem:[%s346 + $0x8] sm:$0xff]
      %v349 = vadd.f32 %v347, %v277
      %v350 = vadd.f32 %v348, %v278
      %351 = vst [vmem:[%s346] sm:$0xff] %v349
      %352 = vst [vmem:[%s346 + $0x8] sm:$0xff] %v350
      %s353 = scalar_lea.vmem [#allocation2], 48
      %v354 = vld [vmem:[%s353] sm:$0xff]
      %v355 = vld [vmem:[%s353 + $0x8] sm:$0xff]
      %v356 = vadd.f32 %v354, %v321
      %v357 = vadd.f32 %v355, %v322
      %358 = vst [vmem:[%s353] sm:$0xff] %v356
      %359 = vst [vmem:[%s353 + $0x8] sm:$0xff] %v357
      %s360 = scalar_lea.vmem [#allocation2], 64
      %v361 = vld [vmem:[%s360] sm:$0xff]
      %v362 = vld [vmem:[%s360 + $0x8] sm:$0xff]
      %v363 = vadd.f32 %v361, %v329
      %v364 = vadd.f32 %v362, %v330
      %365 = vst [vmem:[%s360] sm:$0xff] %v363
      %366 = vst [vmem:[%s360 + $0x8] sm:$0xff] %v364
      %s367 = scalar_lea.vmem [#allocation2], 80
      %v368 = vld [vmem:[%s367] sm:$0xff]
      %v369 = vld [vmem:[%s367 + $0x8] sm:$0xff]
      %v370 = vadd.f32 %v368, %v331
      %v371 = vadd.f32 %v369, %v332
      %372 = vst [vmem:[%s367] sm:$0xff] %v370
      %373 = vst [vmem:[%s367 + $0x8] sm:$0xff] %v371
      %v374 = vrot.slane %v317, 4
      %v375 = vadd.f32 %v317, %v374
      %v376 = vrot.slane %v375, 2
      %v377 = vadd.f32 %v375, %v376
      %v378 = vrot.slane %v377, 1
      %v379 = vadd.f32 %v377, %v378
      %v380 = vrot.slane %v318, 4
      %v381 = vadd.f32 %v318, %v380
      %v382 = vrot.slane %v381, 2
      %v383 = vadd.f32 %v381, %v382
      %v384 = vrot.slane %v383, 1
      %v385 = vadd.f32 %v383, %v384
      %v386 = vmul.f32 %v379, %v379
      %v387 = vmul.f32 %v385, %v385
      %v388 = vsel %vm267, %v386, 0.0
      %v389 = vsel %vm268, %v387, 0.0
      %s390 = scalar_lea.vmem %s238, 6
      %v391 = vld [vmem:[%s390] ss:$8 sm:$0x3]
      %v394 = vrot.slane %v274, 7
      %vm395 = vcmask 1040384
      %v396 = vsel %vm395, %v273, %v394
      %v398 = vadd.f32 %v391, %v396
      %v399 = vlaneseq
      %vm400 = vcmp.ge.s32.totalorder %v399, 0
      %vm401 = vcmp.lt.s32.totalorder %v399, 256
      %vm402 = vmand %vm400, %vm401
      %403 = vst.msk [vmem:[%s390] ss:$8 sm:$0x3] %vm402, %v398
      %404 = vst.msk [vmem:[%s390] ss:$8 sm:$0x0] %vm402, %v398
      %s405 = scalar_lea.vmem %s238, 7
      %v406 = vld [vmem:[%s405] ss:$8 sm:$0x3]
      %v409 = vrot.slane %v389, 7
      %v410 = vsel %vm395, %v388, %v409
      %v412 = vadd.f32 %v406, %v410
      %413 = vst.msk [vmem:[%s405] ss:$8 sm:$0x3] %vm402, %v412
      %414 = vst.msk [vmem:[%s405] ss:$8 sm:$0x0] %vm402, %v412
      // Predicated region
      $region33: #{qpe_loss_fcn.1} parent=27 // pred_check
        %p415 = pneg %p239
      $region34: #{qpe_loss_fcn.1} parent=27 // pred_check_branch
        %417 = sbr.rel (%p415) target = $region36
      $region35: #{qpe_loss_fcn.1} parent=27 // pred_region
        %v418 = vld [vmem:[#allocation2] sm:$0xff]
        %v419 = vld [vmem:[#allocation2 + $0x8] sm:$0xff]
        %v420 = vrot.slane %v418, 4
        %v421 = vadd.f32 %v418, %v420
        %v422 = vrot.slane %v421, 2
        %v423 = vadd.f32 %v421, %v422
        %v424 = vrot.slane %v423, 1
        %v425 = vadd.f32 %v423, %v424
        %v426 = vrot.slane %v419, 4
        %v427 = vadd.f32 %v419, %v426
        %v428 = vrot.slane %v427, 2
        %v429 = vadd.f32 %v427, %v428
        %v430 = vrot.slane %v429, 1
        %v431 = vadd.f32 %v429, %v430
        %v434 = vrot.slane %v431, 7
        %v435 = vsel %vm395, %v425, %v434
        %437 = vst.msk [vmem:[%s238] ss:$8 sm:$0x3] %vm402, %v435
        %438 = vst.msk [vmem:[%s238] ss:$8 sm:$0x0] %vm402, %v435
        %v439 = vld [vmem:[%s339] sm:$0xff]
        %v440 = vld [vmem:[%s339 + $0x8] sm:$0xff]
        %v441 = vrot.slane %v439, 4
        %v442 = vadd.f32 %v439, %v441
        %v443 = vrot.slane %v442, 2
        %v444 = vadd.f32 %v442, %v443
        %v445 = vrot.slane %v444, 1
        %v446 = vadd.f32 %v444, %v445
        %v447 = vrot.slane %v440, 4
        %v448 = vadd.f32 %v440, %v447
        %v449 = vrot.slane %v448, 2
        %v450 = vadd.f32 %v448, %v449
        %v451 = vrot.slane %v450, 1
        %v452 = vadd.f32 %v450, %v451
        %v455 = vrot.slane %v452, 7
        %v456 = vsel %vm395, %v446, %v455
        %s458 = scalar_lea.vmem %s238, 1
        %459 = vst.msk [vmem:[%s458] ss:$8 sm:$0x3] %vm402, %v456
        %460 = vst.msk [vmem:[%s458] ss:$8 sm:$0x0] %vm402, %v456
        %v461 = vld [vmem:[%s346] sm:$0xff]
        %v462 = vld [vmem:[%s346 + $0x8] sm:$0xff]
        %v463 = vrot.slane %v461, 4
        %v464 = vadd.f32 %v461, %v463
        %v465 = vrot.slane %v464, 2
        %v466 = vadd.f32 %v464, %v465
        %v467 = vrot.slane %v466, 1
        %v468 = vadd.f32 %v466, %v467
        %v469 = vrot.slane %v462, 4
        %v470 = vadd.f32 %v462, %v469
        %v471 = vrot.slane %v470, 2
        %v472 = vadd.f32 %v470, %v471
        %v473 = vrot.slane %v472, 1
        %v474 = vadd.f32 %v472, %v473
        %v477 = vrot.slane %v474, 7
        %v478 = vsel %vm395, %v468, %v477
        %s480 = scalar_lea.vmem %s238, 2
        %481 = vst.msk [vmem:[%s480] ss:$8 sm:$0x3] %vm402, %v478
        %482 = vst.msk [vmem:[%s480] ss:$8 sm:$0x0] %vm402, %v478
        %v483 = vld [vmem:[%s353] sm:$0xff]
        %v484 = vld [vmem:[%s353 + $0x8] sm:$0xff]
        %v485 = vrot.slane %v483, 4
        %v486 = vadd.f32 %v483, %v485
        %v487 = vrot.slane %v486, 2
        %v488 = vadd.f32 %v486, %v487
        %v489 = vrot.slane %v488, 1
        %v490 = vadd.f32 %v488, %v489
        %v491 = vrot.slane %v484, 4
        %v492 = vadd.f32 %v484, %v491
        %v493 = vrot.slane %v492, 2
        %v494 = vadd.f32 %v492, %v493
        %v495 = vrot.slane %v494, 1
        %v496 = vadd.f32 %v494, %v495
        %v499 = vrot.slane %v496, 7
        %v500 = vsel %vm395, %v490, %v499
        %s502 = scalar_lea.vmem %s238, 3
        %503 = vst.msk [vmem:[%s502] ss:$8 sm:$0x3] %vm402, %v500
        %504 = vst.msk [vmem:[%s502] ss:$8 sm:$0x0] %vm402, %v500
        %v505 = vld [vmem:[%s360] sm:$0xff]
        %v506 = vld [vmem:[%s360 + $0x8] sm:$0xff]
        %v507 = vrot.slane %v505, 4
        %v508 = vadd.f32 %v505, %v507
        %v509 = vrot.slane %v508, 2
        %v510 = vadd.f32 %v508, %v509
        %v511 = vrot.slane %v510, 1
        %v512 = vadd.f32 %v510, %v511
        %v513 = vrot.slane %v506, 4
        %v514 = vadd.f32 %v506, %v513
        %v515 = vrot.slane %v514, 2
        %v516 = vadd.f32 %v514, %v515
        %v517 = vrot.slane %v516, 1
        %v518 = vadd.f32 %v516, %v517
        %v521 = vrot.slane %v518, 7
        %v522 = vsel %vm395, %v512, %v521
        %s524 = scalar_lea.vmem %s238, 4
        %525 = vst.msk [vmem:[%s524] ss:$8 sm:$0x3] %vm402, %v522
        %526 = vst.msk [vmem:[%s524] ss:$8 sm:$0x0] %vm402, %v522
        %v527 = vld [vmem:[%s367] sm:$0xff]
        %v528 = vld [vmem:[%s367 + $0x8] sm:$0xff]
        %v529 = vrot.slane %v527, 4
        %v530 = vadd.f32 %v527, %v529
        %v531 = vrot.slane %v530, 2
        %v532 = vadd.f32 %v530, %v531
        %v533 = vrot.slane %v532, 1
        %v534 = vadd.f32 %v532, %v533
        %v535 = vrot.slane %v528, 4
        %v536 = vadd.f32 %v528, %v535
        %v537 = vrot.slane %v536, 2
        %v538 = vadd.f32 %v536, %v537
        %v539 = vrot.slane %v538, 1
        %v540 = vadd.f32 %v538, %v539
        %v543 = vrot.slane %v540, 7
        %v544 = vsel %vm395, %v534, %v543
        %s546 = scalar_lea.vmem %s238, 5
        %547 = vst.msk [vmem:[%s546] ss:$8 sm:$0x3] %vm402, %v544
        %548 = vst.msk [vmem:[%s546] ss:$8 sm:$0x0] %vm402, %v544
      $region36: #{qpe_loss_fcn.1} parent=27 // pred_fallthru
        _
      %p549 = scmp.lt.s32.totalorder %s18, 1
      %s550 = scalar_select %p549, %s18, 1
      %p551 = scmp.lt.s32.totalorder %s19, 0
      %s552 = scalar_select %p551, %s19, 0
      %s553 = smul.addr %s552, 2
      %s554 = smul.addr %s550, 2
      %s555 = sadd.s32 %s553, %s554
      %s556 = smul.addr %s555, 8
      %s557 = scalar_lea.vmem %s2, %s556
      // Predicated region
      $region37: #{qpe_loss_fcn.1} parent=27 // pred_check
        %p558 = pneg %p112
      $region38: #{qpe_loss_fcn.1} parent=27 // pred_check_branch
        %560 = sbr.rel (%p558) target = $region40
      $region39: #{qpe_loss_fcn.1} parent=27 // pred_region
        _
      $region40: #{qpe_loss_fcn.1} parent=27 // pred_fallthru
        _
    $region28: #{qpe_loss_fcn.1} parent=5 // pred_fallthru
      _
    %p561 = scmp.le.s32.totalorder 2, %s8
    // Predicated region
    $region41: #{qpe_loss_fcn.1} parent=5 // pred_check
      %p562 = pneg %p561
    $region42: #{qpe_loss_fcn.1} parent=5 // pred_check_branch
      %564 = sbr.rel (%p562) target = $region44
    $region43: #{qpe_loss_fcn.1} parent=5 // pred_region
      %s565 = ssub.s32 %s8, 2
      // Predicated region
      $region45: #{qpe_loss_fcn.1} parent=43 // pred_check
        %p566 = pneg %p118
      $region46: #{qpe_loss_fcn.1} parent=43 // pred_check_branch
        %568 = sbr.rel (%p566) target = $region48
      $region47: #{qpe_loss_fcn.1} parent=43 // pred_region
        %p569 = scmp.lt.s32.totalorder %s21, 1
        %s570 = scalar_select %p569, %s21, 1
        %p571 = scmp.lt.s32.totalorder %s22, 0
        %s572 = scalar_select %p571, %s22, 0
        %s573 = smul.addr %s572, 2
        %s574 = smul.addr %s570, 2
        %s575 = sadd.s32 %s573, %s574
        %s576 = smul.addr %s575, 8
        %s577 = scalar_lea.vmem %s2, %s576
      $region48: #{qpe_loss_fcn.1} parent=43 // pred_fallthru
        _
    $region44: #{qpe_loss_fcn.1} parent=5 // pred_fallthru
      _
  $region6: #{qpe_loss_fcn.1} parent=0 // loop_footer
    %s12 = sadd.s32 1, %s8
  $region7: #{qpe_loss_fcn.1} parent=0 // loop_footer_branch
    %7 = sbr.rel target = $region3
  $region8: #{qpe_loss_fcn.1} parent=0 // loop_exit
    _

</llo_original>
